<compile_context>
chip_gen: v7x
topology: tpu7x:2x2x1
jax: 0.10.0
libtpu: 0.0.40
codegen_flags: <defaults>
</compile_context>

<pallas_src>
import math
import functools

import jax
import jax.numpy as jnp
from jax.experimental import pallas as pl
from jax.experimental.pallas import tpu as pltpu


def _round_up(x, n):
    return (x + n - 1) // n * n


def _arcface_kernel(x_ref, wt_ref, inv_norm_ref, label_ref, out_ref,
                    *, s, cos_m, sin_m, th, mm):
    # x_ref:        (tm, E)   matmul dtype   embeddings (whole padded batch)
    # wt_ref:       (E, tn)   matmul dtype   K-major weight tile (pre-transposed)
    # inv_norm_ref: (1, tn)   f32            1 / max(||w_c||, 1e-12) per class
    # label_ref:    (tm, 1)   int32          ground-truth class ids
    # out_ref:      (tm, tn)  f32            logits tile
    j = pl.program_id(1)
    bm, bn = out_ref.shape

    # (tm,E) x (E,tn) on the MXU, f32 accumulation.
    dots = jnp.dot(x_ref[...], wt_ref[...], preferred_element_type=jnp.float32)

    # Post-matmul per-class scaling == F.normalize(weight, dim=1) (eps = 1e-12).
    cosine = dots * inv_norm_ref[...]                       # (1,tn) broadcasts

    # ArcFace margin (elementwise VPU/EUP epilogue, hidden under the MXU).
    sine = jnp.sqrt(jnp.clip(1.0 - cosine * cosine, 0.0, 1.0))
    phi = cosine * cos_m - sine * sin_m
    phi = jnp.where(cosine > th, phi, cosine - mm)

    # Single select against the absolute class index of this tile, then scale.
    cols = j * bn + jax.lax.broadcasted_iota(jnp.int32, (bm, bn), 1)
    hit = cols == label_ref[...]                            # (tm,1) broadcasts
    out_ref[...] = (jnp.where(hit, phi, cosine) * s).astype(out_ref.dtype)


def arcface_head(x, weight, label, *, s=64.0, m=0.5, tn=512,
                 matmul_dtype=jnp.float32):
    """x: (B, E) f32, weight: (C, E) f32, label: (B,) int -> (B, C) f32 logits.

    matmul_dtype=jnp.bfloat16 halves weight HBM traffic / doubles MXU rate on
    v6e/v7x; the epilogue and accumulation stay in f32.
    """
    B, E = x.shape
    C, E2 = weight.shape
    assert E == E2

    cos_m = math.cos(m)
    sin_m = math.sin(m)
    th = math.cos(math.pi - m)
    mm = math.sin(math.pi - m) * m

    # Hoisted per-class inverse L2 norm, computed once in f32 from the raw weight.
    inv_norm = 1.0 / jnp.maximum(
        jnp.sqrt(jnp.sum(weight.astype(jnp.float32) ** 2, axis=1)), 1e-12)

    # ---- padding / tile selection -------------------------------------------------
    Bp = _round_up(max(B, 8), 8)                 # sublane-aligned batch
    tn = min(_round_up(tn, 128), _round_up(C, 128))
    Cp = _round_up(C, tn)                        # lane-aligned class count

    # Whole padded batch resident -> weights stream from HBM exactly once.
    # TODO(synk): for extremely large B, tile tm and move the batch axis outermost.
    tm = Bp

    # K-major RHS: pre-transpose once in the wrapper (cheap, done by XLA).
    wt = weight.astype(matmul_dtype).T           # (E, C)
    if Cp != C:
        wt = jnp.pad(wt, ((0, 0), (0, Cp - C)))
        inv_norm = jnp.pad(inv_norm, (0, Cp - C))
    inv_norm2d = inv_norm.reshape(1, Cp).astype(jnp.float32)

    xp = x.astype(matmul_dtype)
    label2d = label.reshape(B, 1).astype(jnp.int32)
    if Bp != B:
        xp = jnp.pad(xp, ((0, Bp - B), (0, 0)))
        label2d = jnp.pad(label2d, ((0, Bp - B), (0, 0)), constant_values=-1)

    grid = (Bp // tm, Cp // tn)

    # VMEM budget (double-buffered inputs + output) -> explicit scoped limit that is
    # large enough on v5e (16 MiB default) and safe on v7x (64 MiB physical).
    ib = jnp.dtype(matmul_dtype).itemsize
    est = 2 * (tm * E * ib + E * tn * ib + tn * 4 + tm * 4 + tm * tn * 4)
    vmem_limit = int(min(max(2 * est + (2 << 20), 32 << 20), 56 << 20))

    kernel = functools.partial(
        _arcface_kernel, s=s, cos_m=cos_m, sin_m=sin_m, th=th, mm=mm)

    out = pl.pallas_call(
        kernel,
        out_shape=jax.ShapeDtypeStruct((Bp, Cp), jnp.float32),
        grid_spec=pltpu.PrefetchScalarGridSpec(
            num_scalar_prefetch=0,
            grid=grid,
            in_specs=[
                pl.BlockSpec((tm, E), lambda i, j: (i, 0)),   # x (batch-resident)
                pl.BlockSpec((E, tn), lambda i, j: (0, j)),   # weight^T tile
                pl.BlockSpec((1, tn), lambda i, j: (0, j)),   # inv_norm tile
                pl.BlockSpec((tm, 1), lambda i, j: (i, 0)),   # labels (resident)
            ],
            out_specs=pl.BlockSpec((tm, tn), lambda i, j: (i, j)),
        ),
        compiler_params=pltpu.CompilerParams(
            dimension_semantics=("parallel", "parallel"),
            vmem_limit_bytes=vmem_limit,
        ),
    )(xp, wt, inv_norm2d, label2d)

    return out[:B, :C]


def arcface_head_ref(x, weight, label, *, s=64.0, m=0.5):
    """Pure-JAX reference mirroring the PyTorch module."""
    cos_m, sin_m = math.cos(m), math.sin(m)
    th = math.cos(math.pi - m)
    mm = math.sin(math.pi - m) * m
    w_n = weight / jnp.maximum(jnp.linalg.norm(weight, axis=1, keepdims=True), 1e-12)
    cosine = x @ w_n.T
    sine = jnp.sqrt(jnp.clip(1.0 - cosine ** 2, 0.0, 1.0))
    phi = cosine * cos_m - sine * sin_m
    phi = jnp.where(cosine > th, phi, cosine - mm)
    one_hot = jax.nn.one_hot(label, cosine.shape[1], dtype=jnp.float32)
    return (one_hot * phi + (1.0 - one_hot) * cosine) * s


if __name__ == "__main__":
    # Small synthetic configuration consistent with the module's shapes.
    B, E, C = 8, 32, 256          # batch, embedding_size, num_classes
    key = jax.random.PRNGKey(0)
    kx, kw, kl = jax.random.split(key, 3)

    # Deterministic Xavier-uniform init for weight (num_classes, embedding_size).
    bound = math.sqrt(6.0 / (C + E))
    weight = jax.random.uniform(kw, (C, E), jnp.float32, -bound, bound)

    x = jax.random.normal(kx, (B, E), jnp.float32)
    label = jax.random.randint(kl, (B,), 0, C, jnp.int32)

    out = jax.block_until_ready(arcface_head(x, weight, label))

    ref = arcface_head_ref(x, weight, label)
    assert out.shape == (B, C)
    assert jnp.allclose(out, ref, atol=1e-3, rtol=1e-3), "mismatch vs reference"

    print("KERNEL_OK")
</pallas_src>

<mosaic_0001>
module attributes {stable_mosaic.version = 11 : i64} {
  func.func @_arcface_kernel(%arg0: i32, %arg1: i32, %arg2: memref<8x32xf32, #tpu.memory_space<vmem>>, %arg3: memref<32x256xf32, #tpu.memory_space<vmem>>, %arg4: memref<1x256xf32, #tpu.memory_space<vmem>>, %arg5: memref<8x1xi32, #tpu.memory_space<vmem>>, %arg6: memref<8x256xf32, #tpu.memory_space<vmem>>) attributes {dimension_semantics = [#tpu.dimension_semantics<parallel>, #tpu.dimension_semantics<parallel>], iteration_bounds = array<i64: 1, 1>, scalar_prefetch = 0 : i64, scratch_operands = 0 : i64, tpu.core_type = #tpu.core_type<tc>, window_params = [{transform_indices = @transform_0, window_bounds = array<i64: 8, 32>}, {transform_indices = @transform_1, window_bounds = array<i64: 32, 256>}, {transform_indices = @transform_2, window_bounds = array<i64: 1, 256>}, {transform_indices = @transform_3, window_bounds = array<i64: 8, 1>}, {transform_indices = @transform_4, window_bounds = array<i64: 8, 256>}]} {
    %c0 = arith.constant 0 : index
    %c0_0 = arith.constant 0 : index
    %0 = vector.load %arg2[%c0, %c0_0] : memref<8x32xf32, #tpu.memory_space<vmem>>, vector<8x32xf32>
    %c0_1 = arith.constant 0 : index
    %c0_2 = arith.constant 0 : index
    %1 = vector.load %arg3[%c0_1, %c0_2] : memref<32x256xf32, #tpu.memory_space<vmem>>, vector<32x256xf32>
    %cst = arith.constant dense<0.000000e+00> : vector<8x256xf32>
    %2 = tpu.matmul %0, %1, %cst {dimension_numbers = #tpu.dot_dimension_numbers<[1], [0], [0], [1], [0, 0, 1, 1], [], []>} : vector<8x32xf32>, vector<32x256xf32>, vector<8x256xf32> -> vector<8x256xf32>
    %c0_3 = arith.constant 0 : index
    %c0_4 = arith.constant 0 : index
    %3 = vector.load %arg4[%c0_3, %c0_4] : memref<1x256xf32, #tpu.memory_space<vmem>>, vector<1x256xf32>
    %4 = vector.broadcast %3 : vector<1x256xf32> to vector<8x256xf32>
    %5 = arith.mulf %2, %4 : vector<8x256xf32>
    %6 = arith.mulf %5, %5 : vector<8x256xf32>
    %cst_5 = arith.constant 1.000000e+00 : f32
    %7 = vector.broadcast %cst_5 : f32 to vector<8x256xf32>
    %8 = arith.subf %7, %6 : vector<8x256xf32>
    %cst_6 = arith.constant 0.000000e+00 : f32
    %cst_7 = arith.constant 1.000000e+00 : f32
    %9 = vector.broadcast %cst_6 : f32 to vector<8x256xf32>
    %10 = arith.maximumf %9, %8 : vector<8x256xf32>
    %11 = vector.broadcast %cst_7 : f32 to vector<8x256xf32>
    %12 = arith.minimumf %11, %10 : vector<8x256xf32>
    %13 = math.sqrt %12 : vector<8x256xf32>
    %cst_8 = arith.constant 0.87758255 : f32
    %14 = vector.broadcast %cst_8 : f32 to vector<8x256xf32>
    %15 = arith.mulf %5, %14 : vector<8x256xf32>
    %cst_9 = arith.constant 0.47942555 : f32
    %16 = vector.broadcast %cst_9 : f32 to vector<8x256xf32>
    %17 = arith.mulf %13, %16 : vector<8x256xf32>
    %18 = arith.subf %15, %17 : vector<8x256xf32>
    %cst_10 = arith.constant -0.87758255 : f32
    %19 = vector.broadcast %cst_10 : f32 to vector<8x256xf32>
    %20 = arith.cmpf ogt, %5, %19 : vector<8x256xf32>
    %cst_11 = arith.constant 0.239712775 : f32
    %21 = vector.broadcast %cst_11 : f32 to vector<8x256xf32>
    %22 = arith.subf %5, %21 : vector<8x256xf32>
    %23 = arith.select %20, %18, %22 : vector<8x256xi1>, vector<8x256xf32>
    %c256_i32 = arith.constant 256 : i32
    %24 = arith.muli %arg1, %c256_i32 : i32
    %25 = tpu.iota {dimensions = array<i32: 1>} : vector<8x256xi32>
    %26 = vector.broadcast %24 : i32 to vector<8x256xi32>
    %27 = arith.addi %26, %25 : vector<8x256xi32>
    %c0_12 = arith.constant 0 : index
    %c0_13 = arith.constant 0 : index
    %28 = vector.load %arg5[%c0_12, %c0_13] : memref<8x1xi32, #tpu.memory_space<vmem>>, vector<8x1xi32>
    %29 = vector.broadcast %28 : vector<8x1xi32> to vector<8x256xi32>
    %30 = arith.cmpi eq, %27, %29 : vector<8x256xi32>
    %31 = arith.select %30, %23, %5 : vector<8x256xi1>, vector<8x256xf32>
    %cst_14 = arith.constant 6.400000e+01 : f32
    %32 = vector.broadcast %cst_14 : f32 to vector<8x256xf32>
    %33 = arith.mulf %31, %32 : vector<8x256xf32>
    %c0_15 = arith.constant 0 : index
    %c0_16 = arith.constant 0 : index
    %34 = vector.load %arg6[%c0_15, %c0_16] : memref<8x256xf32, #tpu.memory_space<vmem>>, vector<8x256xf32>
    tpu.vector_store %arg6[%c0_15, %c0_16], %33 {strides = array<i32>} : memref<8x256xf32, #tpu.memory_space<vmem>>, vector<8x256xf32>,
    return
  }
  func.func @transform_0(%arg0: i32, %arg1: i32) -> (i32, i32) {
    %c0_i32 = arith.constant 0 : i32
    %c0_i32_0 = arith.constant 0 : i32
    return %arg0, %c0_i32 : i32, i32
  }
  func.func @transform_1(%arg0: i32, %arg1: i32) -> (i32, i32) {
    %c0_i32 = arith.constant 0 : i32
    %c0_i32_0 = arith.constant 0 : i32
    return %c0_i32, %arg1 : i32, i32
  }
  func.func @transform_2(%arg0: i32, %arg1: i32) -> (i32, i32) {
    %c0_i32 = arith.constant 0 : i32
    %c0_i32_0 = arith.constant 0 : i32
    return %c0_i32, %arg1 : i32, i32
  }
  func.func @transform_3(%arg0: i32, %arg1: i32) -> (i32, i32) {
    %c0_i32 = arith.constant 0 : i32
    %c0_i32_0 = arith.constant 0 : i32
    return %arg0, %c0_i32 : i32, i32
  }
  func.func @transform_4(%arg0: i32, %arg1: i32) -> (i32, i32) {
    %c0_i32 = arith.constant 0 : i32
    return %arg0, %arg1 : i32, i32
  }
}

</mosaic_0001>

<llo_original>
// kernel: tpu_custom_call.1
$region0: #{tpu_custom_call.1}
  #allocation0 [shape = 'u32[]', space=smem, size = 0x4, offset = 0x4, fixed_abs, tag = 'smem constant byte address 0x4 - core index']
  #allocation1 [shape = 'u32[144,128]{1,0:T(1,128)}', space=vmem, size = 0x12000, scoped, tag = 'internal scratch']
  %s0 = inlined_call_operand.vmem [shape: f32[8,32], index: 0, kind: input, shape index: {}]
  %s1 = inlined_call_operand.hbm [shape: f32[32,256], index: 1, kind: input, shape index: {}]
  %s2 = inlined_call_operand.vmem [shape: f32[1,256], index: 2, kind: input, shape index: {}]
  %s3 = inlined_call_operand.vmem [shape: s32[8,1], index: 3, kind: input, shape index: {}]
  %s4 = inlined_call_operand.hbm [shape: f32[8,256], index: 4, kind: output, shape index: {}]
  %s5 = sld [smem:[#allocation0]]
  $region30: #{tpu_custom_call.1} parent=0
    _
  %s7 = ssub.s32 1, %s5
  %s8 = scalar_select 0, %s7, %s5
  $region1: #{tpu_custom_call.1} parent=0
    #allocation2 [shape = 'u8[32768]{0}', space=vmem, size = 0x8000, scoped, tag = 'input window, operand 1, single buffered']
    #allocation3 [shape = 's32[1]{0}', space=sflag, size = 0x4, scoped, tag = 'scoped memory for tpu_custom_call.1']
    #allocation4 [shape = 's32[1]{0}', space=sflag, size = 0x4, scoped, tag = 'scoped memory for tpu_custom_call.1']
    #allocation5 [shape = 'u8[8192]{0}', space=vmem, size = 0x2000, scoped, tag = 'output window, operand 0, single buffered']
    %9 = vsyncpa [#allocation3], 0
    %10 = vsyncpa [#allocation4], 0
    // Predicated region
    $region2: #{tpu_custom_call.1} parent=1 // pred_check
      _
    $region3: #{tpu_custom_call.1} parent=1 // pred_check_branch
      %12 = sbr.rel (0) target = $region5
    $region4: #{tpu_custom_call.1} parent=1 // pred_region
      _
    $region5: #{tpu_custom_call.1} parent=1 // pred_fallthru
      _
    // Predicated region
    $region6: #{tpu_custom_call.1} parent=1 // pred_check
      _
    $region7: #{tpu_custom_call.1} parent=1 // pred_check_branch
      %14 = sbr.rel (0) target = $region9
    $region8: #{tpu_custom_call.1} parent=1 // pred_region
      %s16 = ssub.s32 1024, 1024
      %17 = vsyncadd [#allocation3], %s16
      %s18 = sshll.u32 [#allocation2], 4
      %s19 = int_to_ptr.vmem [resolvable:$true] %s18
      %24 = dma.hbm_to_vmem [thread:$0]  %s1, 1024, %s19, [#allocation3], 256, 256, 16
    $region9: #{tpu_custom_call.1} parent=1 // pred_fallthru
      _
    // Predicated region
    $region10: #{tpu_custom_call.1} parent=1 // pred_check
      _
    $region11: #{tpu_custom_call.1} parent=1 // pred_check_branch
      %26 = sbr.rel (0) target = $region13
    $region12: #{tpu_custom_call.1} parent=1 // pred_region
      _
    $region13: #{tpu_custom_call.1} parent=1 // pred_fallthru
      _
    // Predicated region
    $region14: #{tpu_custom_call.1} parent=1 // pred_check
      _
    $region15: #{tpu_custom_call.1} parent=1 // pred_check_branch
      %28 = sbr.rel (0) target = $region17
    $region16: #{tpu_custom_call.1} parent=1 // pred_region
      _
    $region17: #{tpu_custom_call.1} parent=1 // pred_fallthru
      _
    // Predicated region
    $region18: #{tpu_custom_call.1} parent=1 // pred_check
      _
    $region19: #{tpu_custom_call.1} parent=1 // pred_check_branch
      %30 = sbr.rel (0) target = $region21
    $region20: #{tpu_custom_call.1} parent=1 // pred_region
      %31 = dma.done [#allocation3], 1024
    $region21: #{tpu_custom_call.1} parent=1 // pred_fallthru
      _
    %v32 = vld [vmem:[%s0] sm:$0xff]
    %v33 = vld [vmem:[#allocation2] sm:$0xff]
    %v34 = vld [vmem:[#allocation2 + $0x8] sm:$0xff]
    %v35 = vld [vmem:[#allocation2 + $0x10] sm:$0xff]
    %v36 = vld [vmem:[#allocation2 + $0x18] sm:$0xff]
    %v37 = vld [vmem:[#allocation2 + $0x20] sm:$0xff]
    %v38 = vld [vmem:[#allocation2 + $0x28] sm:$0xff]
    %v39 = vld [vmem:[#allocation2 + $0x30] sm:$0xff]
    %v40 = vld [vmem:[#allocation2 + $0x38] sm:$0xff]
    %vm41 = vcmask 261120
    %v43 = vsel %vm41, %v32, 0
    %45 = vmatprep.subr.mxu0 %v34
    %46 = vmatpush1.msra.mxu0 %v33
    %47 = vmatprep.subr.mxu0 %v36
    %48 = vmatpush1.msra.mxu0 %v35
    %49 = vmatprep.subr.mxu0 %v38
    %50 = vmatpush1.msra.mxu0 %v37
    %51 = vmatprep.subr.mxu0 %v40
    %52 = vmatpush1.msra.mxu0 %v39
    %53 = vmatprep.subr.mxu0 0.0
    %54 = vmatpush1.msra.mxu0 0.0
    %55 = vmatprep.subr.mxu0 0.0
    %56 = vmatpush1.msra.mxu0 0.0
    %57 = vmatprep.subr.mxu0 0.0
    %58 = vmatpush1.msra.mxu0 0.0
    %59 = vmatprep.subr.mxu0 0.0
    %60 = vmatpush1.msra.mxu0 0.0
    %61 = vmatprep.subr.mxu0 0.0
    %62 = vmatpush1.msra.mxu0 0.0
    %63 = vmatprep.subr.mxu0 0.0
    %64 = vmatpush1.msra.mxu0 0.0
    %65 = vmatprep.subr.mxu0 0.0
    %66 = vmatpush1.msra.mxu0 0.0
    %67 = vmatprep.subr.mxu0 0.0
    %68 = vmatpush1.msra.mxu0 0.0
    %69 = vmatprep.subr.mxu0 0.0
    %70 = vmatpush1.msra.mxu0 0.0
    %71 = vmatprep.subr.mxu0 0.0
    %72 = vmatpush1.msra.mxu0 0.0
    %73 = vmatprep.subr.mxu0 0.0
    %74 = vmatpush1.msra.mxu0 0.0
    %75 = vmatprep.subr.mxu0 0.0
    %76 = vmatpush1.msra.mxu0 0.0
    %77 = vmatprep.subr.mxu0 0.0
    %78 = vmatpush1.msra.mxu0 0.0
    %79 = vmatprep.subr.mxu0 0.0
    %80 = vmatpush1.msra.mxu0 0.0
    %81 = vmatprep.subr.mxu0 0.0
    %82 = vmatpush1.msra.mxu0 0.0
    %83 = vmatprep.subr.mxu0 0.0
    %84 = vmatpush1.msra.mxu0 0.0
    %85 = vmatprep.subr.mxu0 0.0
    %86 = vmatpush1.msra.mxu0 0.0
    %87 = vmatprep.subr.mxu0 0.0
    %88 = vmatpush1.msra.mxu0 0.0
    %89 = vmatprep.subr.mxu0 0.0
    %90 = vmatpush1.msra.mxu0 0.0
    %91 = vmatprep.subr.mxu0 0.0
    %92 = vmatpush1.msra.mxu0 0.0
    %93 = vmatprep.subr.mxu0 0.0
    %94 = vmatpush1.msra.mxu0 0.0
    %95 = vmatprep.subr.mxu0 0.0
    %96 = vmatpush1.msra.mxu0 0.0
    %97 = vmatprep.subr.mxu0 0.0
    %98 = vmatpush1.msra.mxu0 0.0
    %99 = vmatprep.subr.mxu0 0.0
    %100 = vmatpush1.msra.mxu0 0.0
    %101 = vmatprep.subr.mxu0 0.0
    %102 = vmatpush1.msra.mxu0 0.0
    %103 = vmatprep.subr.mxu0 0.0
    %104 = vmatpush1.msra.mxu0 0.0
    %105 = vmatprep.subr.mxu0 0.0
    %106 = vmatpush1.msra.mxu0 0.0
    %107 = vmatprep.subr.mxu0 0.0
    %108 = vmatpush1.msra.mxu0 0.0
    %109 = vmatprep.mubr.f32.mxu0 0.0
    %110 = vmatmul.mubr.f32.gmra.mrb[0].mxu0 %v43
    %v111 = vpop.f32.mrb[0].mxu0
    %v112 = vadd.f32 0.0, %v111
    %v113 = vpop.f32.mrb[0].mxu0
    %v114 = vadd.f32 0.0, %v113
    %115 = vdwg.mxu0
    %v116 = vld [vmem:[%s2] sm:$0x3]
    %v118 = vlaneseq
    %v119 = vshrl.u32 %v118, 7
    %v120 = vsub.s32 0, %v119
    %v121 = vrot.slane %v116, %v120
    %v122 = vlaneseq
    %v123 = vshrl.u32 %v122, 7
    %v124 = vsub.s32 1, %v123
    %v125 = vrot.slane %v116, %v124
    %v128 = vmul.f32 %v112, %v121
    %v129 = vmul.f32 %v114, %v125
    %v130 = vmul.f32 %v128, %v128
    %v131 = vmul.f32 %v129, %v129
    %v132 = vsub.f32 1.0, %v130
    %v133 = vsub.f32 1.0, %v131
    %v134 = vmax.f32 %v132, 0.0
    %v135 = vmax.f32 %v133, 0.0
    %v136 = vmin.f32 %v134, 1.0
    %v137 = vmin.f32 %v135, 1.0
    %v138 = vrsqrt.pop %v136
    %v139 = vmul.f32 %v136, %v138
    %vm140 = vcmp.eq.f32.partialorder %v136, inf
    %v141 = vsel %vm140, %v136, %v139
    %vm142 = vcmp.eq.f32.partialorder %v136, 0.0
    %v143 = vand.u32 %v136, 2147483648
    %v144 = vsel %vm142, %v143, %v141
    %v145 = vrsqrt.pop %v137
    %v146 = vmul.f32 %v137, %v145
    %vm147 = vcmp.eq.f32.partialorder %v137, inf
    %v148 = vsel %vm147, %v137, %v146
    %vm149 = vcmp.eq.f32.partialorder %v137, 0.0
    %v150 = vand.u32 %v137, 2147483648
    %v151 = vsel %vm149, %v150, %v148
    %v152 = vmul.f32 %v128, 0.87758255
    %v153 = vmul.f32 %v129, 0.87758255
    %v154 = vmul.f32 %v144, 0.47942555
    %v155 = vmul.f32 %v151, 0.47942555
    %v156 = vsub.f32 %v152, %v154
    %v157 = vsub.f32 %v153, %v155
    %vm158 = vcmp.gt.f32.partialorder %v128, -0.87758255
    %vm159 = vcmp.gt.f32.partialorder %v129, -0.87758255
    %v160 = vsub.f32 %v128, 0.23971277
    %v161 = vsub.f32 %v129, 0.23971277
    %v162 = vsel %vm158, %v156, %v160
    %v163 = vsel %vm159, %v157, %v161
    %s164 = smul.u32 0, 256
    %v165 = vlaneseq
    %v166 = vand.u32 %v165, 127
    %v167 = vadd.s32 %v166, 128
    %v168 = vstv %s164
    %v169 = vadd.s32 %v168, %v166
    %v170 = vadd.s32 %v168, %v167
    %v171 = vld [vmem:[%s3] sm:$0xff]
    %172 = vset.pattern.permute.xlu0 0
    %173 = vperm.xlu0 %172, %v171
    %v174 = vpop.permute.xlu0 %173
    %vm175 = vcmp.eq.s32.totalorder %v169, %v174
    %vm176 = vcmp.eq.s32.totalorder %v170, %v174
    %v177 = vsel %vm175, %v162, %v128
    %v178 = vsel %vm176, %v163, %v129
    %v179 = vmul.f32 %v177, 64.0
    %v180 = vmul.f32 %v178, 64.0
    %181 = vst [vmem:[#allocation5] sm:$0xff] %v179
    %182 = vst [vmem:[#allocation5 + $0x8] sm:$0xff] %v180
    // Predicated region
    $region22: #{tpu_custom_call.1} parent=1 // pred_check
      _
    $region23: #{tpu_custom_call.1} parent=1 // pred_check_branch
      %184 = sbr.rel (0) target = $region25
    $region24: #{tpu_custom_call.1} parent=1 // pred_region
      %s186 = ssub.s32 256, 256
      %187 = vsyncadd [#allocation4], %s186
      %s189 = sshll.u32 [#allocation5], 4
      %s190 = int_to_ptr.vmem [resolvable:$true] %s189
      %192 = dma.vmem_to_hbm [thread:$0]  %s190, 256, %s4, [#allocation4]
    $region25: #{tpu_custom_call.1} parent=1 // pred_fallthru
      _
    // Predicated region
    $region26: #{tpu_custom_call.1} parent=1 // pred_check
      _
    $region27: #{tpu_custom_call.1} parent=1 // pred_check_branch
      %194 = sbr.rel (0) target = $region29
    $region28: #{tpu_custom_call.1} parent=1 // pred_region
      %195 = dma.done [#allocation4], 256
    $region29: #{tpu_custom_call.1} parent=1 // pred_fallthru
      _
    %196 = vsyncpa [#allocation3], 1
    %197 = vsyncpa [#allocation4], 1

</llo_original>
